<compile_context>
chip_gen: v6e
topology: v6e:2x2x1
jax: 0.10.0
libtpu: 0.0.40
codegen_flags: <defaults>
</compile_context>

<pallas_src>
import functools

import jax
import jax.numpy as jnp
from jax.experimental import pallas as pl
from jax.experimental.pallas import tpu as pltpu

SUBLANE = 8  # f32 sublane count


def _round_up(x, m):
    return (x + m - 1) // m * m


def _mlp_kernel(x_ref, w1_ref, b1_ref, w2_ref, b2_ref, o_ref):
    # fc1: x @ W1^T + b1, ReLU.  Cast x f32->bf16 in-kernel (VPU has huge slack),
    # MXU dot in bf16, f32 accumulate.
    x = x_ref[...].astype(w1_ref.dtype)
    h = jnp.dot(x, w1_ref[...], preferred_element_type=jnp.float32)
    h = jnp.maximum(h + b1_ref[...], 0.0)                       # [TB, H] f32
    # fc2: h @ W2^T + b2, sigmoid.
    z = jnp.dot(h.astype(w2_ref.dtype), w2_ref[...],
                preferred_element_type=jnp.float32)
    z = z + b2_ref[...]                                         # [TB, out] f32
    # sigmoid(z) = 1 / (1 + exp(-z)); exp runs on the EUP, exact reciprocal for
    # tight parity with the f32 reference.
    o_ref[...] = pl.reciprocal(1.0 + jnp.exp(-z)).astype(o_ref.dtype)


def prepare_params(fc1_w, fc1_b, fc2_w, fc2_b, matmul_dtype=jnp.bfloat16):
    """One-time param prep: transpose to [in, out] and cast matmul operands to
    bf16.  No feature-dim padding (full-dim blocks are legal and the MXU work is
    negligible at these sizes).  Returns a dict of ARRAYS only (jit-safe)."""
    return dict(
        w1t=fc1_w.T.astype(matmul_dtype),                    # [in,  hidden]
        b1=fc1_b.reshape(1, -1).astype(jnp.float32),          # [1,   hidden]
        w2t=fc2_w.T.astype(matmul_dtype),                     # [hidden, out]
        b2=fc2_b.reshape(1, -1).astype(jnp.float32),          # [1,   out]
    )


@functools.partial(jax.jit, static_argnames=("tile_b",))
def basic_bp_forward(x, params, *, tile_b=8192):
    """Pallas TPU forward of basic_bp.

    x:       [B, input_num] float32
    params:  output of prepare_params (transposed / bf16 weights)
    returns: [B, output_num] float32
    """
    B, in_dim = x.shape
    w1t, b1, w2t, b2 = params["w1t"], params["b1"], params["w2t"], params["b2"]
    hidden = w1t.shape[1]
    out_dim = w2t.shape[1]

    # ---- static tile selection (all Python ints) -------------------------
    tile_b = _round_up(tile_b, SUBLANE)
    B8 = _round_up(B, SUBLANE)
    if B8 <= 512:
        TB = B8                                   # tiny batch: single tile
    elif B8 <= tile_b:
        TB = _round_up((B8 + 1) // 2, SUBLANE)    # >=2 tiles so v7x megacore helps
    else:
        TB = tile_b
    Bp = _round_up(B, TB)
    grid = (Bp // TB,)

    xp = x
    if Bp != B:
        xp = jnp.pad(xp, ((0, Bp - B), (0, 0)))

    out_padded = pl.pallas_call(
        _mlp_kernel,
        out_shape=jax.ShapeDtypeStruct((Bp, out_dim), jnp.float32),
        grid_spec=pltpu.PrefetchScalarGridSpec(
            num_scalar_prefetch=0,
            grid=grid,
            in_specs=[
                pl.BlockSpec((TB, in_dim), lambda i: (i, 0)),     # x: batch-tiled, f32
                pl.BlockSpec((in_dim, hidden), lambda i: (0, 0)),  # W1^T: resident
                pl.BlockSpec((1, hidden), lambda i: (0, 0)),       # b1:   resident
                pl.BlockSpec((hidden, out_dim), lambda i: (0, 0)), # W2^T: resident
                pl.BlockSpec((1, out_dim), lambda i: (0, 0)),      # b2:   resident
            ],
            out_specs=pl.BlockSpec((TB, out_dim), lambda i: (i, 0)),  # compact store
        ),
        compiler_params=pltpu.CompilerParams(
            dimension_semantics=("parallel",),   # shard batch tiles across TCs
            vmem_limit_bytes=32 * 1024 * 1024,   # ~8 MiB working set at TB=8192; safe on v5e/v6e/v7x
        ),
    )(xp, w1t, b1, w2t, b2)

    # B and out_dim are static Python ints -> trivial row trim only.
    return out_padded[:B]


def _reference(x, fc1_w, fc1_b, fc2_w, fc2_b):
    h = jnp.maximum(x @ fc1_w.T + fc1_b, 0.0)
    return jax.nn.sigmoid(h @ fc2_w.T + fc2_b)


if __name__ == "__main__":
    # small shapes consistent with the module: input=32, hidden=64, output=16
    B, input_num, hidden_num, output_num = 8, 32, 64, 16

    key = jax.random.PRNGKey(0)
    kx, k1w, k1b, k2w, k2b = jax.random.split(key, 5)

    x = jax.random.normal(kx, (B, input_num), dtype=jnp.float32)

    # deterministic param init mimicking nn.Linear's U(-1/sqrt(fan_in), 1/sqrt(fan_in))
    bound1 = 1.0 / (input_num ** 0.5)
    fc1_w = jax.random.uniform(k1w, (hidden_num, input_num), jnp.float32, -bound1, bound1)
    fc1_b = jax.random.uniform(k1b, (hidden_num,), jnp.float32, -bound1, bound1)
    bound2 = 1.0 / (hidden_num ** 0.5)
    fc2_w = jax.random.uniform(k2w, (output_num, hidden_num), jnp.float32, -bound2, bound2)
    fc2_b = jax.random.uniform(k2b, (output_num,), jnp.float32, -bound2, bound2)

    params = prepare_params(fc1_w, fc1_b, fc2_w, fc2_b)

    # 1) small batch (single grid step)
    out = jax.block_until_ready(basic_bp_forward(x, params))
    ref = _reference(x, fc1_w, fc1_b, fc2_w, fc2_b)
    assert out.shape == (B, output_num)
    # bf16 matmul operands -> compare with a loose tolerance
    err = float(jnp.max(jnp.abs(out - ref)))
    assert jnp.allclose(out, ref, atol=2e-2, rtol=2e-2), err

    # 2) mid-size batch: split into 2 parallel tiles (v7x megacore path)
    B2 = 3000
    x2 = jax.random.normal(jax.random.PRNGKey(1), (B2, input_num), dtype=jnp.float32)
    out2 = jax.block_until_ready(basic_bp_forward(x2, params))
    ref2 = _reference(x2, fc1_w, fc1_b, fc2_w, fc2_b)
    assert out2.shape == (B2, output_num)
    assert jnp.allclose(out2, ref2, atol=2e-2, rtol=2e-2), float(jnp.max(jnp.abs(out2 - ref2)))

    # 3) batch larger than tile_b: multi-tile streamed grid (3 tiles of 1024 rows)
    out3 = jax.block_until_ready(basic_bp_forward(x2, params, tile_b=1024))
    assert out3.shape == (B2, output_num)
    assert jnp.allclose(out3, ref2, atol=2e-2, rtol=2e-2), float(jnp.max(jnp.abs(out3 - ref2)))

    print("KERNEL_OK")
</pallas_src>

<mosaic_0001>
module attributes {stable_mosaic.version = 11 : i64} {
  func.func @_mlp_kernel(%arg0: i32, %arg1: memref<8x32xf32, #tpu.memory_space<vmem>>, %arg2: memref<32x64xbf16, #tpu.memory_space<vmem>>, %arg3: memref<1x64xf32, #tpu.memory_space<vmem>>, %arg4: memref<64x16xbf16, #tpu.memory_space<vmem>>, %arg5: memref<1x16xf32, #tpu.memory_space<vmem>>, %arg6: memref<8x16xf32, #tpu.memory_space<vmem>>) attributes {dimension_semantics = [#tpu.dimension_semantics<parallel>], iteration_bounds = array<i64: 1>, scalar_prefetch = 0 : i64, scratch_operands = 0 : i64, tpu.core_type = #tpu.core_type<tc>, window_params = [{transform_indices = @transform_0, window_bounds = array<i64: 8, 32>}, {pipeline_mode = #tpu.pipeline_mode<synchronous>, transform_indices = @transform_1, window_bounds = array<i64: 32, 64>}, {pipeline_mode = #tpu.pipeline_mode<synchronous>, transform_indices = @transform_2, window_bounds = array<i64: 1, 64>}, {pipeline_mode = #tpu.pipeline_mode<synchronous>, transform_indices = @transform_3, window_bounds = array<i64: 64, 16>}, {pipeline_mode = #tpu.pipeline_mode<synchronous>, transform_indices = @transform_4, window_bounds = array<i64: 1, 16>}, {transform_indices = @transform_5, window_bounds = array<i64: 8, 16>}]} {
    %c0 = arith.constant 0 : index
    %c0_0 = arith.constant 0 : index
    %0 = vector.load %arg1[%c0, %c0_0] : memref<8x32xf32, #tpu.memory_space<vmem>>, vector<8x32xf32>
    %1 = arith.truncf %0 : vector<8x32xf32> to vector<8x32xbf16>
    %c0_1 = arith.constant 0 : index
    %c0_2 = arith.constant 0 : index
    %2 = vector.load %arg2[%c0_1, %c0_2] : memref<32x64xbf16, #tpu.memory_space<vmem>>, vector<32x64xbf16>
    %cst = arith.constant dense<0.000000e+00> : vector<8x64xf32>
    %3 = tpu.matmul %1, %2, %cst {dimension_numbers = #tpu.dot_dimension_numbers<[1], [0], [0], [1], [0, 0, 1, 1], [], []>} : vector<8x32xbf16>, vector<32x64xbf16>, vector<8x64xf32> -> vector<8x64xf32>
    %c0_3 = arith.constant 0 : index
    %c0_4 = arith.constant 0 : index
    %4 = vector.load %arg3[%c0_3, %c0_4] : memref<1x64xf32, #tpu.memory_space<vmem>>, vector<1x64xf32>
    %5 = vector.broadcast %4 : vector<1x64xf32> to vector<8x64xf32>
    %6 = arith.addf %3, %5 : vector<8x64xf32>
    %cst_5 = arith.constant 0.000000e+00 : f32
    %7 = vector.broadcast %cst_5 : f32 to vector<8x64xf32>
    %8 = arith.maximumf %6, %7 : vector<8x64xf32>
    %9 = arith.truncf %8 : vector<8x64xf32> to vector<8x64xbf16>
    %c0_6 = arith.constant 0 : index
    %c0_7 = arith.constant 0 : index
    %10 = vector.load %arg4[%c0_6, %c0_7] : memref<64x16xbf16, #tpu.memory_space<vmem>>, vector<64x16xbf16>
    %cst_8 = arith.constant dense<0.000000e+00> : vector<8x16xf32>
    %11 = tpu.matmul %9, %10, %cst_8 {dimension_numbers = #tpu.dot_dimension_numbers<[1], [0], [0], [1], [0, 0, 1, 1], [], []>} : vector<8x64xbf16>, vector<64x16xbf16>, vector<8x16xf32> -> vector<8x16xf32>
    %c0_9 = arith.constant 0 : index
    %c0_10 = arith.constant 0 : index
    %12 = vector.load %arg5[%c0_9, %c0_10] : memref<1x16xf32, #tpu.memory_space<vmem>>, vector<1x16xf32>
    %13 = vector.broadcast %12 : vector<1x16xf32> to vector<8x16xf32>
    %14 = arith.addf %11, %13 : vector<8x16xf32>
    %cst_11 = arith.constant 0.000000e+00 : f32
    %15 = vector.broadcast %cst_11 : f32 to vector<8x16xf32>
    %16 = arith.subf %15, %14 : vector<8x16xf32>
    %17 = math.exp %16 : vector<8x16xf32>
    %cst_12 = arith.constant 1.000000e+00 : f32
    %18 = vector.broadcast %cst_12 : f32 to vector<8x16xf32>
    %19 = arith.addf %18, %17 : vector<8x16xf32>
    %20 = tpu.reciprocal %19 : vector<8x16xf32> -> vector<8x16xf32>
    %c0_13 = arith.constant 0 : index
    %c0_14 = arith.constant 0 : index
    %21 = vector.load %arg6[%c0_13, %c0_14] : memref<8x16xf32, #tpu.memory_space<vmem>>, vector<8x16xf32>
    tpu.vector_store %arg6[%c0_13, %c0_14], %20 {strides = array<i32>} : memref<8x16xf32, #tpu.memory_space<vmem>>, vector<8x16xf32>,
    return
  }
  func.func @transform_0(%arg0: i32) -> (i32, i32) {
    %c0_i32 = arith.constant 0 : i32
    %c0_i32_0 = arith.constant 0 : i32
    return %arg0, %c0_i32 : i32, i32
  }
  func.func @transform_1(%arg0: i32) -> (i32, i32) {
    %c0_i32 = arith.constant 0 : i32
    %c0_i32_0 = arith.constant 0 : i32
    %c0_i32_1 = arith.constant 0 : i32
    return %c0_i32, %c0_i32_0 : i32, i32
  }
  func.func @transform_2(%arg0: i32) -> (i32, i32) {
    %c0_i32 = arith.constant 0 : i32
    %c0_i32_0 = arith.constant 0 : i32
    %c0_i32_1 = arith.constant 0 : i32
    return %c0_i32, %c0_i32_0 : i32, i32
  }
  func.func @transform_3(%arg0: i32) -> (i32, i32) {
    %c0_i32 = arith.constant 0 : i32
    %c0_i32_0 = arith.constant 0 : i32
    %c0_i32_1 = arith.constant 0 : i32
    return %c0_i32, %c0_i32_0 : i32, i32
  }
  func.func @transform_4(%arg0: i32) -> (i32, i32) {
    %c0_i32 = arith.constant 0 : i32
    %c0_i32_0 = arith.constant 0 : i32
    %c0_i32_1 = arith.constant 0 : i32
    return %c0_i32, %c0_i32_0 : i32, i32
  }
  func.func @transform_5(%arg0: i32) -> (i32, i32) {
    %c0_i32 = arith.constant 0 : i32
    %c0_i32_0 = arith.constant 0 : i32
    return %arg0, %c0_i32 : i32, i32
  }
}

</mosaic_0001>

<llo_original>
// kernel: basic_bp_forward.1
$region0: #{basic_bp_forward.1}
  #allocation0 [shape = 'u32[]', space=smem, size = 0x4, offset = 0x4, fixed_abs, tag = 'smem constant byte address 0x4 - core index']
  #allocation1 [shape = 'u32[144,128]{1,0:T(1,128)}', space=vmem, size = 0x12000, scoped, tag = 'internal scratch']
  %s0 = inlined_call_operand.vmem [shape: f32[8,32], index: 0, kind: input, shape index: {}]
  %s1 = inlined_call_operand.vmem [shape: bf16[32,64], index: 1, kind: input, shape index: {}]
  %s2 = inlined_call_operand.vmem [shape: f32[1,64], index: 2, kind: input, shape index: {}]
  %s3 = inlined_call_operand.vmem [shape: bf16[64,16], index: 3, kind: input, shape index: {}]
  %s4 = inlined_call_operand.vmem [shape: f32[1,16], index: 4, kind: input, shape index: {}]
  %s5 = inlined_call_operand.hbm [shape: f32[8,16], index: 5, kind: output, shape index: {}]
  %s6 = sld [smem:[#allocation0]]
  $region30: #{basic_bp_forward.1} parent=0
    _
  %s8 = ssub.s32 1, %s6
  %s9 = scalar_select 0, %s8, %s6
  $region1: #{basic_bp_forward.1} parent=0
    #allocation2 [shape = 'u8[4096]{0}', space=vmem, size = 0x1000, scoped, tag = 'output window, operand 0, single buffered']
    #allocation3 [shape = 's32[1]{0}', space=sflag, size = 0x4, scoped, tag = 'scoped memory for basic_bp_forward.1']
    %10 = vsyncpa [#allocation3], 0
    // Predicated region
    $region2: #{basic_bp_forward.1} parent=1 // pred_check
      _
    $region3: #{basic_bp_forward.1} parent=1 // pred_check_branch
      %12 = sbr.rel (0) target = $region5
    $region4: #{basic_bp_forward.1} parent=1 // pred_region
      _
    $region5: #{basic_bp_forward.1} parent=1 // pred_fallthru
      _
    // Predicated region
    $region6: #{basic_bp_forward.1} parent=1 // pred_check
      _
    $region7: #{basic_bp_forward.1} parent=1 // pred_check_branch
      %14 = sbr.rel (0) target = $region9
    $region8: #{basic_bp_forward.1} parent=1 // pred_region
      _
    $region9: #{basic_bp_forward.1} parent=1 // pred_fallthru
      _
    // Predicated region
    $region10: #{basic_bp_forward.1} parent=1 // pred_check
      _
    $region11: #{basic_bp_forward.1} parent=1 // pred_check_branch
      %16 = sbr.rel (0) target = $region13
    $region12: #{basic_bp_forward.1} parent=1 // pred_region
      _
    $region13: #{basic_bp_forward.1} parent=1 // pred_fallthru
      _
    // Predicated region
    $region14: #{basic_bp_forward.1} parent=1 // pred_check
      _
    $region15: #{basic_bp_forward.1} parent=1 // pred_check_branch
      %18 = sbr.rel (0) target = $region17
    $region16: #{basic_bp_forward.1} parent=1 // pred_region
      _
    $region17: #{basic_bp_forward.1} parent=1 // pred_fallthru
      _
    // Predicated region
    $region18: #{basic_bp_forward.1} parent=1 // pred_check
      _
    $region19: #{basic_bp_forward.1} parent=1 // pred_check_branch
      %20 = sbr.rel (0) target = $region21
    $region20: #{basic_bp_forward.1} parent=1 // pred_region
      _
    $region21: #{basic_bp_forward.1} parent=1 // pred_fallthru
      _
    %v22 = vld [vmem:[%s0] sm:$0xff]
    %v23 = vpack.c.bf16 %v22, %v22
    %v24 = vld [vmem:[%s1] sm:$0xf]
    %v25 = vld [vmem:[%s1 + $0x4] sm:$0xf]
    %v26 = vld [vmem:[%s1 + $0x8] sm:$0xf]
    %v27 = vld [vmem:[%s1 + $0xc] sm:$0xf]
    %v28 = vld [vmem:[%s2] sm:$0x1]
    %v30 = vlaneseq
    %v31 = vshrl.u32 %v30, 7
    %v32 = vsub.s32 0, %v31
    %v33 = vrot.slane %v28, %v32
    %v39 = vunpack.c.l.b16 %v24
    %v40 = vunpack.c.l.b16 %v25
    %v41 = vunpack.c.l.b16 %v26
    %v42 = vunpack.c.l.b16 %v27
    %v43 = vpack.c.b16 %v40, %v39
    %v44 = vpack.c.b16 %v42, %v41
    %vm47 = vcmask 261120
    %v49 = vsel %vm47, %v23, 0
    %51 = vmatprep.subr.bf16.mxu0 0
    %52 = vmatpush1.bf16.msra.mxu0 0
    %53 = vmatprep.subr.bf16.mxu0 0
    %54 = vmatpush1.bf16.msra.mxu0 0
    %55 = vmatprep.subr.bf16.mxu0 0
    %56 = vmatpush1.bf16.msra.mxu0 0
    %57 = vmatprep.subr.bf16.mxu0 0
    %58 = vmatpush1.bf16.msra.mxu0 0
    %59 = vmatprep.subr.bf16.mxu0 0
    %60 = vmatpush1.bf16.msra.mxu0 0
    %61 = vmatprep.subr.bf16.mxu0 0
    %62 = vmatpush1.bf16.msra.mxu0 0
    %63 = vmatprep.subr.bf16.mxu0 0
    %64 = vmatpush1.bf16.msra.mxu0 %v44
    %65 = vmatprep.subr.bf16.mxu0 0
    %66 = vmatpush1.bf16.msra.mxu0 %v43
    %67 = vmatprep.subr.bf16.mxu0 0
    %68 = vmatpush2.bf16.msra.mxu0 0
    %69 = vmatprep.subr.bf16.mxu0 0
    %70 = vmatpush2.bf16.msra.mxu0 0
    %71 = vmatprep.subr.bf16.mxu0 0
    %72 = vmatpush2.bf16.msra.mxu0 0
    %73 = vmatprep.subr.bf16.mxu0 0
    %74 = vmatpush2.bf16.msra.mxu0 0
    %75 = vmatprep.subr.bf16.mxu0 0
    %76 = vmatpush2.bf16.msra.mxu0 0
    %77 = vmatprep.subr.bf16.mxu0 0
    %78 = vmatpush2.bf16.msra.mxu0 0
    %79 = vmatprep.subr.bf16.mxu0 0
    %80 = vmatpush2.bf16.msra.mxu0 0
    %81 = vmatprep.subr.bf16.mxu0 0
    %82 = vmatpush2.bf16.msra.mxu0 0
    %83 = vmatprep.mubr.bf16.mxu0 0
    %84 = vmatmul.mubr.bf16.gmra.mxu0 %v49
    %v85 = vpop.f32.mrf.mxu0
    %v86 = vadd.f32 %v33, %v85
    %v87 = vpop.f32.mrf.mxu0
    %v88 = vpop.f32.mrf.mxu0
    %v89 = vpop.f32.mrf.mxu0
    %90 = vdwg.mxu0
    %v91 = vmax.f32 %v86, 0.0
    %v92 = vpack.c.bf16 %v91, %v91
    %v93 = vld [vmem:[%s3] sm:$0xf]
    %v94 = vld [vmem:[%s3 + $0x4] sm:$0xf]
    %v95 = vld [vmem:[%s3 + $0x8] sm:$0xf]
    %v96 = vld [vmem:[%s3 + $0xc] sm:$0xf]
    %v97 = vld [vmem:[%s3 + $0x10] sm:$0xf]
    %v98 = vld [vmem:[%s3 + $0x14] sm:$0xf]
    %v99 = vld [vmem:[%s3 + $0x18] sm:$0xf]
    %v100 = vld [vmem:[%s3 + $0x1c] sm:$0xf]
    %v101 = vld [vmem:[%s4] sm:$0x1]
    %v103 = vlaneseq
    %v104 = vshrl.u32 %v103, 7
    %v105 = vsub.s32 0, %v104
    %v106 = vrot.slane %v101, %v105
    %v116 = vunpack.c.l.b16 %v93
    %v117 = vunpack.c.l.b16 %v94
    %v118 = vunpack.c.l.b16 %v95
    %v119 = vunpack.c.l.b16 %v96
    %v120 = vunpack.c.l.b16 %v97
    %v121 = vunpack.c.l.b16 %v98
    %v122 = vunpack.c.l.b16 %v99
    %v123 = vunpack.c.l.b16 %v100
    %v124 = vpack.c.b16 %v117, %v116
    %v125 = vpack.c.b16 %v119, %v118
    %v126 = vpack.c.b16 %v121, %v120
    %v127 = vpack.c.b16 %v123, %v122
    %vm132 = vcmask 523264
    %v134 = vsel %vm132, %v92, 0
    %136 = vmatprep.subr.bf16.mxu0 0
    %137 = vmatpush1.bf16.msra.mxu0 0
    %138 = vmatprep.subr.bf16.mxu0 0
    %139 = vmatpush1.bf16.msra.mxu0 0
    %140 = vmatprep.subr.bf16.mxu0 0
    %141 = vmatpush1.bf16.msra.mxu0 0
    %142 = vmatprep.subr.bf16.mxu0 0
    %143 = vmatpush1.bf16.msra.mxu0 0
    %144 = vmatprep.subr.bf16.mxu0 0
    %145 = vmatpush1.bf16.msra.mxu0 %v127
    %146 = vmatprep.subr.bf16.mxu0 0
    %147 = vmatpush1.bf16.msra.mxu0 %v126
    %148 = vmatprep.subr.bf16.mxu0 0
    %149 = vmatpush1.bf16.msra.mxu0 %v125
    %150 = vmatprep.subr.bf16.mxu0 0
    %151 = vmatpush1.bf16.msra.mxu0 %v124
    %152 = vmatprep.subr.bf16.mxu0 0
    %153 = vmatpush2.bf16.msra.mxu0 0
    %154 = vmatprep.subr.bf16.mxu0 0
    %155 = vmatpush2.bf16.msra.mxu0 0
    %156 = vmatprep.subr.bf16.mxu0 0
    %157 = vmatpush2.bf16.msra.mxu0 0
    %158 = vmatprep.subr.bf16.mxu0 0
    %159 = vmatpush2.bf16.msra.mxu0 0
    %160 = vmatprep.subr.bf16.mxu0 0
    %161 = vmatpush2.bf16.msra.mxu0 0
    %162 = vmatprep.subr.bf16.mxu0 0
    %163 = vmatpush2.bf16.msra.mxu0 0
    %164 = vmatprep.subr.bf16.mxu0 0
    %165 = vmatpush2.bf16.msra.mxu0 0
    %166 = vmatprep.subr.bf16.mxu0 0
    %167 = vmatpush2.bf16.msra.mxu0 0
    %168 = vmatprep.mubr.bf16.mxu0 0
    %169 = vmatmul.mubr.bf16.gmra.mxu0 %v134
    %v170 = vpop.f32.mrf.mxu0
    %v171 = vadd.f32 %v106, %v170
    %v172 = vpop.f32.mrf.mxu0
    %v173 = vpop.f32.mrf.mxu0
    %v174 = vpop.f32.mrf.mxu0
    %175 = vdwg.mxu0
    %v176 = vsub.f32 0.0, %v171
    %v177 = vmul.f32 %v176, 1.442695
    %v178 = vpow.pop %v177
    %v179 = vadd.f32 %v178, 1.0
    %v180 = vrcp.pop %v179
    %vm181 = vcmask 130048
    %182 = vst.msk [vmem:[#allocation2] sm:$0xff] %vm181, %v180
    // Predicated region
    $region22: #{basic_bp_forward.1} parent=1 // pred_check
      _
    $region23: #{basic_bp_forward.1} parent=1 // pred_check_branch
      %184 = sbr.rel (0) target = $region25
    $region24: #{basic_bp_forward.1} parent=1 // pred_region
      %s186 = ssub.s32 128, 128
      %187 = vsyncadd [#allocation3], %s186
      %s189 = sshll.u32 [#allocation2], 4
      %s190 = int_to_ptr.vmem [resolvable:$true] %s189
      %192 = dma.vmem_to_hbm [thread:$0]  %s190, 128, %s5, [#allocation3]
    $region25: #{basic_bp_forward.1} parent=1 // pred_fallthru
      _
    // Predicated region
    $region26: #{basic_bp_forward.1} parent=1 // pred_check
      _
    $region27: #{basic_bp_forward.1} parent=1 // pred_check_branch
      %194 = sbr.rel (0) target = $region29
    $region28: #{basic_bp_forward.1} parent=1 // pred_region
      %195 = dma.done [#allocation3], 128
    $region29: #{basic_bp_forward.1} parent=1 // pred_fallthru
      _
    %196 = vsyncpa [#allocation3], 1

</llo_original>
